<compile_context>
chip_gen: v6e
topology: v6e:2x2x1
jax: 0.10.0
libtpu: 0.0.40
codegen_flags: <defaults>
</compile_context>

<pallas_src>
import jax
import jax.numpy as jnp
from jax.experimental import pallas as pl
from jax.experimental.pallas import tpu as pltpu

LANE = 128            # TPU lane width (last dim of a vreg)
SUBLANE = 8           # TPU sublane width (f32)
HIDDEN = 64           # DQNModel hidden width (padded to LANE inside the weights)
DEFAULT_TILE_B = 1024  # batch tile for large (replay-buffer sized) batches


def _round_up(n, m):
    return ((n + m - 1) // m) * m


def dqn_kernel(x_ref, w1_ref, b1_ref, w2_ref, b2_ref, w3_ref, b3_ref, out_ref):
    # Fully fused 3-layer MLP on one batch tile: three bf16 MXU matmuls with
    # f32 accumulation, bias-add + ReLU on the VPU in f32, single narrow store.
    x = x_ref[...].astype(jnp.bfloat16)                       # [tile_b, state_size]
    h1 = jnp.dot(x, w1_ref[...], preferred_element_type=jnp.float32) + b1_ref[...]
    h1 = jnp.maximum(h1, 0.0)
    h2 = jnp.dot(h1.astype(jnp.bfloat16), w2_ref[...],
                 preferred_element_type=jnp.float32) + b2_ref[...]
    h2 = jnp.maximum(h2, 0.0)
    q = jnp.dot(h2.astype(jnp.bfloat16), w3_ref[...],
                preferred_element_type=jnp.float32) + b3_ref[...]
    out_ref[...] = q.astype(out_ref.dtype)                    # [tile_b, action_size]


def init_params(key, state_size, action_size, hidden=HIDDEN):
    """PyTorch nn.Linear-style init (uniform +/- 1/sqrt(fan_in)).

    Weights are stored transposed ([in, out]) relative to PyTorch and cast to
    bf16 for the MXU.  Only the hidden dims are zero-padded to 128 lanes
    (w1: [state_size, 128], w2: [128, 128], w3: [128, action_size]); the
    input-feature and action dims stay native so HBM traffic stays native.
    Biases stay f32 (the elementwise path is f32)."""
    ks = jax.random.split(key, 6)
    h_pad = _round_up(hidden, LANE)

    def linear(kw, kb, fan_in, fan_out, pad_in, pad_out):
        bound = float(fan_in) ** -0.5
        w = jax.random.uniform(kw, (fan_in, fan_out), jnp.float32, -bound, bound)
        b = jax.random.uniform(kb, (1, fan_out), jnp.float32, -bound, bound)
        w_p = jnp.zeros((pad_in, pad_out), jnp.float32).at[:fan_in, :fan_out].set(w)
        b_p = jnp.zeros((1, pad_out), jnp.float32).at[:, :fan_out].set(b)
        return w_p.astype(jnp.bfloat16), b_p

    w1, b1 = linear(ks[0], ks[1], state_size, hidden, state_size, h_pad)
    w2, b2 = linear(ks[2], ks[3], hidden, hidden, h_pad, h_pad)
    w3, b3 = linear(ks[4], ks[5], hidden, action_size, h_pad, action_size)
    return {"w1": w1, "b1": b1, "w2": w2, "b2": b2, "w3": w3, "b3": b3,
            "state_size": state_size, "action_size": action_size, "hidden": hidden}


def dqn_forward(x, params, tile_b=DEFAULT_TILE_B):
    """x: [B, state_size] float array. Returns [B, action_size] float32 Q-values."""
    B, state_size = x.shape
    assert state_size == params["state_size"]
    action_size = params["action_size"]
    w1, b1, w2, b2, w3, b3 = (params[k] for k in ("w1", "b1", "w2", "b2", "w3", "b3"))
    h_pad = w1.shape[1]

    # Adaptive batch tile: big tiles for replay-buffer batches (amortize the
    # ~0.35us/step overhead), a tight sublane-aligned tile for tiny batches so
    # online action selection is a single small tile with no wrapper pad.
    tile_b = _round_up(min(tile_b, _round_up(B, SUBLANE)), SUBLANE)
    b_pad = _round_up(B, tile_b)
    grid = (b_pad // tile_b,)

    if x.dtype != jnp.float32:
        x = x.astype(jnp.float32)
    # Pad batch rows only (feature dim stays native: 64 B/row of HBM traffic).
    x_p = jnp.pad(x, ((0, b_pad - B), (0, 0))) if b_pad != B else x

    const = lambda shape: pl.BlockSpec(shape, lambda i: (0, 0))

    # Advisory cost estimate so XLA can overlap this call with surrounding work.
    flops = 2 * b_pad * (state_size * h_pad + h_pad * h_pad + h_pad * action_size)
    weight_bytes = (w1.size + w2.size + w3.size) * 2 + (b1.size + b2.size + b3.size) * 4
    bytes_accessed = b_pad * state_size * 4 + weight_bytes + b_pad * action_size * 4

    # VMEM budget tied to the actual tile: double-buffered x/out tiles, the
    # (double-buffered) resident weights, f32/bf16 intermediates, + headroom.
    x_tile_bytes = tile_b * state_size * 4
    out_tile_bytes = tile_b * action_size * 4
    inter_bytes = 6 * tile_b * h_pad * 4          # h1/h2 f32 + bf16 copies (generous)
    vmem_limit = int(2 * 2 * (x_tile_bytes + out_tile_bytes)
                     + 2 * weight_bytes + inter_bytes + (4 << 20))
    vmem_limit = min(vmem_limit, 48 << 20)        # headroom inside v7x's 64 MiB VMEM

    out_padded = pl.pallas_call(
        dqn_kernel,
        out_shape=jax.ShapeDtypeStruct((b_pad, action_size), jnp.float32),
        grid=grid,
        in_specs=[
            pl.BlockSpec((tile_b, state_size), lambda i: (i, 0)),  # x: streamed per tile
            const(w1.shape), const(b1.shape),                      # weights: resident
            const(w2.shape), const(b2.shape),
            const(w3.shape), const(b3.shape),
        ],
        out_specs=pl.BlockSpec((tile_b, action_size), lambda i: (i, 0)),
        compiler_params=pltpu.CompilerParams(
            dimension_semantics=("parallel",),   # v7x: shard batch tiles over 2 TCs
            vmem_limit_bytes=vmem_limit,
        ),
        cost_estimate=pl.CostEstimate(
            flops=flops, transcendentals=0, bytes_accessed=bytes_accessed),
    )(x_p, w1, b1, w2, b2, w3, b3)

    return out_padded[:B] if b_pad != B else out_padded


def dqn_reference_bf16(x, params):
    """Pure-JAX reference using the same bf16 weights (tight check)."""
    xb = x.astype(jnp.bfloat16)
    h1 = jnp.maximum(jnp.dot(xb, params["w1"],
                             preferred_element_type=jnp.float32) + params["b1"], 0.0)
    h2 = jnp.maximum(jnp.dot(h1.astype(jnp.bfloat16), params["w2"],
                             preferred_element_type=jnp.float32) + params["b2"], 0.0)
    q = jnp.dot(h2.astype(jnp.bfloat16), params["w3"],
                preferred_element_type=jnp.float32) + params["b3"]
    return q


def dqn_reference_f32(x, params):
    """Full-f32 reference (original PyTorch semantics, loose check vs bf16)."""
    h1 = jnp.maximum(x @ params["w1"].astype(jnp.float32) + params["b1"], 0.0)
    h2 = jnp.maximum(h1 @ params["w2"].astype(jnp.float32) + params["b2"], 0.0)
    return h2 @ params["w3"].astype(jnp.float32) + params["b3"]


if __name__ == "__main__":
    key = jax.random.PRNGKey(0)
    k_params, k_x, k_x2, k_x3 = jax.random.split(key, 4)

    batch, state_size, action_size = 8, 16, 4
    params = init_params(k_params, state_size, action_size)

    # 1) Online-inference path: tiny batch, single tight tile, no pad/slice ops.
    x = jax.random.normal(k_x, (batch, state_size), jnp.float32)
    out = jax.block_until_ready(dqn_forward(x, params))
    assert out.shape == (batch, action_size)
    assert jnp.allclose(out, dqn_reference_bf16(x, params), atol=1e-3, rtol=1e-3), \
        "mismatch vs bf16 reference"
    assert jnp.allclose(out, dqn_reference_f32(x, params), atol=3e-2, rtol=3e-2), \
        "mismatch vs f32 reference"

    # 2) Multi-tile grid path (tile_b override so grid > 1 at a small batch).
    b2 = 384
    x2 = jax.random.normal(k_x2, (b2, state_size), jnp.float32)
    out2 = jax.block_until_ready(dqn_forward(x2, params, tile_b=128))
    assert out2.shape == (b2, action_size)
    assert jnp.allclose(out2, dqn_reference_bf16(x2, params), atol=1e-3, rtol=1e-3), \
        "mismatch vs bf16 reference (multi-tile)"

    # 3) Large-tile path with batch padding (B not a multiple of the tile).
    b3 = 1030
    x3 = jax.random.normal(k_x3, (b3, state_size), jnp.float32)
    out3 = jax.block_until_ready(dqn_forward(x3, params))
    assert out3.shape == (b3, action_size)
    assert jnp.allclose(out3, dqn_reference_bf16(x3, params), atol=1e-3, rtol=1e-3), \
        "mismatch vs bf16 reference (padded batch)"

    print("KERNEL_OK")
</pallas_src>

<mosaic_0001>
module attributes {stable_mosaic.version = 11 : i64} {
  func.func @dqn_kernel(%arg0: i32, %arg1: memref<8x16xf32, #tpu.memory_space<vmem>>, %arg2: memref<16x128xbf16, #tpu.memory_space<vmem>>, %arg3: memref<1x128xf32, #tpu.memory_space<vmem>>, %arg4: memref<128x128xbf16, #tpu.memory_space<vmem>>, %arg5: memref<1x128xf32, #tpu.memory_space<vmem>>, %arg6: memref<128x4xbf16, #tpu.memory_space<vmem>>, %arg7: memref<1x4xf32, #tpu.memory_space<vmem>>, %arg8: memref<8x4xf32, #tpu.memory_space<vmem>>) attributes {dimension_semantics = [#tpu.dimension_semantics<parallel>], iteration_bounds = array<i64: 1>, scalar_prefetch = 0 : i64, scratch_operands = 0 : i64, tpu.core_type = #tpu.core_type<tc>, window_params = [{transform_indices = @transform_0, window_bounds = array<i64: 8, 16>}, {pipeline_mode = #tpu.pipeline_mode<synchronous>, transform_indices = @transform_1, window_bounds = array<i64: 16, 128>}, {pipeline_mode = #tpu.pipeline_mode<synchronous>, transform_indices = @transform_2, window_bounds = array<i64: 1, 128>}, {pipeline_mode = #tpu.pipeline_mode<synchronous>, transform_indices = @transform_3, window_bounds = array<i64: 128, 128>}, {pipeline_mode = #tpu.pipeline_mode<synchronous>, transform_indices = @transform_4, window_bounds = array<i64: 1, 128>}, {pipeline_mode = #tpu.pipeline_mode<synchronous>, transform_indices = @transform_5, window_bounds = array<i64: 128, 4>}, {pipeline_mode = #tpu.pipeline_mode<synchronous>, transform_indices = @transform_6, window_bounds = array<i64: 1, 4>}, {transform_indices = @transform_7, window_bounds = array<i64: 8, 4>}]} {
    %c0 = arith.constant 0 : index
    %c0_0 = arith.constant 0 : index
    %0 = vector.load %arg1[%c0, %c0_0] : memref<8x16xf32, #tpu.memory_space<vmem>>, vector<8x16xf32>
    %1 = arith.truncf %0 : vector<8x16xf32> to vector<8x16xbf16>
    %c0_1 = arith.constant 0 : index
    %c0_2 = arith.constant 0 : index
    %2 = vector.load %arg2[%c0_1, %c0_2] : memref<16x128xbf16, #tpu.memory_space<vmem>>, vector<16x128xbf16>
    %cst = arith.constant dense<0.000000e+00> : vector<8x128xf32>
    %3 = tpu.matmul %1, %2, %cst {dimension_numbers = #tpu.dot_dimension_numbers<[1], [0], [0], [1], [0, 0, 1, 1], [], []>} : vector<8x16xbf16>, vector<16x128xbf16>, vector<8x128xf32> -> vector<8x128xf32>
    %c0_3 = arith.constant 0 : index
    %c0_4 = arith.constant 0 : index
    %4 = vector.load %arg3[%c0_3, %c0_4] : memref<1x128xf32, #tpu.memory_space<vmem>>, vector<1x128xf32>
    %5 = vector.broadcast %4 : vector<1x128xf32> to vector<8x128xf32>
    %6 = arith.addf %3, %5 : vector<8x128xf32>
    %cst_5 = arith.constant 0.000000e+00 : f32
    %7 = vector.broadcast %cst_5 : f32 to vector<8x128xf32>
    %8 = arith.maximumf %6, %7 : vector<8x128xf32>
    %9 = arith.truncf %8 : vector<8x128xf32> to vector<8x128xbf16>
    %c0_6 = arith.constant 0 : index
    %c0_7 = arith.constant 0 : index
    %10 = vector.load %arg4[%c0_6, %c0_7] : memref<128x128xbf16, #tpu.memory_space<vmem>>, vector<128x128xbf16>
    %cst_8 = arith.constant dense<0.000000e+00> : vector<8x128xf32>
    %11 = tpu.matmul %9, %10, %cst_8 {dimension_numbers = #tpu.dot_dimension_numbers<[1], [0], [0], [1], [0, 0, 1, 1], [], []>} : vector<8x128xbf16>, vector<128x128xbf16>, vector<8x128xf32> -> vector<8x128xf32>
    %c0_9 = arith.constant 0 : index
    %c0_10 = arith.constant 0 : index
    %12 = vector.load %arg5[%c0_9, %c0_10] : memref<1x128xf32, #tpu.memory_space<vmem>>, vector<1x128xf32>
    %13 = vector.broadcast %12 : vector<1x128xf32> to vector<8x128xf32>
    %14 = arith.addf %11, %13 : vector<8x128xf32>
    %cst_11 = arith.constant 0.000000e+00 : f32
    %15 = vector.broadcast %cst_11 : f32 to vector<8x128xf32>
    %16 = arith.maximumf %14, %15 : vector<8x128xf32>
    %17 = arith.truncf %16 : vector<8x128xf32> to vector<8x128xbf16>
    %c0_12 = arith.constant 0 : index
    %c0_13 = arith.constant 0 : index
    %18 = vector.load %arg6[%c0_12, %c0_13] : memref<128x4xbf16, #tpu.memory_space<vmem>>, vector<128x4xbf16>
    %cst_14 = arith.constant dense<0.000000e+00> : vector<8x4xf32>
    %19 = tpu.matmul %17, %18, %cst_14 {dimension_numbers = #tpu.dot_dimension_numbers<[1], [0], [0], [1], [0, 0, 1, 1], [], []>} : vector<8x128xbf16>, vector<128x4xbf16>, vector<8x4xf32> -> vector<8x4xf32>
    %c0_15 = arith.constant 0 : index
    %c0_16 = arith.constant 0 : index
    %20 = vector.load %arg7[%c0_15, %c0_16] : memref<1x4xf32, #tpu.memory_space<vmem>>, vector<1x4xf32>
    %21 = vector.broadcast %20 : vector<1x4xf32> to vector<8x4xf32>
    %22 = arith.addf %19, %21 : vector<8x4xf32>
    %c0_17 = arith.constant 0 : index
    %c0_18 = arith.constant 0 : index
    %23 = vector.load %arg8[%c0_17, %c0_18] : memref<8x4xf32, #tpu.memory_space<vmem>>, vector<8x4xf32>
    tpu.vector_store %arg8[%c0_17, %c0_18], %22 {strides = array<i32>} : memref<8x4xf32, #tpu.memory_space<vmem>>, vector<8x4xf32>,
    return
  }
  func.func @transform_0(%arg0: i32) -> (i32, i32) {
    %c0_i32 = arith.constant 0 : i32
    %c0_i32_0 = arith.constant 0 : i32
    return %arg0, %c0_i32 : i32, i32
  }
  func.func @transform_1(%arg0: i32) -> (i32, i32) {
    %c0_i32 = arith.constant 0 : i32
    %c0_i32_0 = arith.constant 0 : i32
    %c0_i32_1 = arith.constant 0 : i32
    return %c0_i32, %c0_i32_0 : i32, i32
  }
  func.func @transform_2(%arg0: i32) -> (i32, i32) {
    %c0_i32 = arith.constant 0 : i32
    %c0_i32_0 = arith.constant 0 : i32
    %c0_i32_1 = arith.constant 0 : i32
    return %c0_i32, %c0_i32_0 : i32, i32
  }
  func.func @transform_3(%arg0: i32) -> (i32, i32) {
    %c0_i32 = arith.constant 0 : i32
    %c0_i32_0 = arith.constant 0 : i32
    %c0_i32_1 = arith.constant 0 : i32
    return %c0_i32, %c0_i32_0 : i32, i32
  }
  func.func @transform_4(%arg0: i32) -> (i32, i32) {
    %c0_i32 = arith.constant 0 : i32
    %c0_i32_0 = arith.constant 0 : i32
    %c0_i32_1 = arith.constant 0 : i32
    return %c0_i32, %c0_i32_0 : i32, i32
  }
  func.func @transform_5(%arg0: i32) -> (i32, i32) {
    %c0_i32 = arith.constant 0 : i32
    %c0_i32_0 = arith.constant 0 : i32
    %c0_i32_1 = arith.constant 0 : i32
    return %c0_i32, %c0_i32_0 : i32, i32
  }
  func.func @transform_6(%arg0: i32) -> (i32, i32) {
    %c0_i32 = arith.constant 0 : i32
    %c0_i32_0 = arith.constant 0 : i32
    %c0_i32_1 = arith.constant 0 : i32
    return %c0_i32, %c0_i32_0 : i32, i32
  }
  func.func @transform_7(%arg0: i32) -> (i32, i32) {
    %c0_i32 = arith.constant 0 : i32
    %c0_i32_0 = arith.constant 0 : i32
    return %arg0, %c0_i32 : i32, i32
  }
}

</mosaic_0001>

<llo_original>
// kernel: tpu_custom_call.1
$region0: #{tpu_custom_call.1}
  #allocation0 [shape = 'u32[]', space=smem, size = 0x4, offset = 0x4, fixed_abs, tag = 'smem constant byte address 0x4 - core index']
  #allocation1 [shape = 'u32[144,128]{1,0:T(1,128)}', space=vmem, size = 0x12000, scoped, tag = 'internal scratch']
  %s0 = inlined_call_operand.hbm [shape: f32[8,16], index: 0, kind: input, shape index: {}]
  %s1 = inlined_call_operand.hbm [shape: bf16[16,128], index: 1, kind: input, shape index: {}]
  %s2 = inlined_call_operand.vmem [shape: f32[1,128], index: 2, kind: input, shape index: {}]
  %s3 = inlined_call_operand.vmem [shape: bf16[128,128], index: 3, kind: input, shape index: {}]
  %s4 = inlined_call_operand.vmem [shape: f32[1,128], index: 4, kind: input, shape index: {}]
  %s5 = inlined_call_operand.vmem [shape: bf16[128,4], index: 5, kind: input, shape index: {}]
  %s6 = inlined_call_operand.vmem [shape: f32[1,4], index: 6, kind: input, shape index: {}]
  %s7 = inlined_call_operand.vmem [shape: f32[8,4], index: 7, kind: output, shape index: {}]
  %s8 = sld [smem:[#allocation0]]
  $region46: #{tpu_custom_call.1} parent=0
    _
  %s10 = ssub.s32 1, %s8
  %s11 = scalar_select 0, %s10, %s8
  $region1: #{tpu_custom_call.1} parent=0
    #allocation2 [shape = 'u8[4096]{0}', space=vmem, size = 0x1000, scoped, tag = 'input window, operand 0, single buffered']
    #allocation3 [shape = 's32[1]{0}', space=sflag, size = 0x4, scoped, tag = 'scoped memory for tpu_custom_call.1']
    #allocation4 [shape = 'u8[4096]{0}', space=vmem, size = 0x1000, scoped, tag = 'input window, operand 1, single buffered']
    #allocation5 [shape = 's32[1]{0}', space=sflag, size = 0x4, scoped, tag = 'scoped memory for tpu_custom_call.1']
    %12 = vsyncpa [#allocation3], 0
    %13 = vsyncpa [#allocation5], 0
    // Predicated region
    $region2: #{tpu_custom_call.1} parent=1 // pred_check
      _
    $region3: #{tpu_custom_call.1} parent=1 // pred_check_branch
      %15 = sbr.rel (0) target = $region5
    $region4: #{tpu_custom_call.1} parent=1 // pred_region
      %s17 = ssub.s32 128, 128
      %18 = vsyncadd [#allocation3], %s17
      %s20 = sshll.u32 [#allocation2], 4
      %s21 = int_to_ptr.vmem [resolvable:$true] %s20
      %23 = dma.hbm_to_vmem [thread:$0]  %s0, 128, %s21, [#allocation3]
    $region5: #{tpu_custom_call.1} parent=1 // pred_fallthru
      _
    // Predicated region
    $region6: #{tpu_custom_call.1} parent=1 // pred_check
      _
    $region7: #{tpu_custom_call.1} parent=1 // pred_check_branch
      %25 = sbr.rel (0) target = $region9
    $region8: #{tpu_custom_call.1} parent=1 // pred_region
      %s27 = ssub.s32 128, 128
      %28 = vsyncadd [#allocation5], %s27
      %s29 = sshll.u32 [#allocation4], 4
      %s30 = int_to_ptr.vmem [resolvable:$true] %s29
      %35 = dma.hbm_to_vmem [thread:$0]  %s1, 128, %s30, [#allocation5], 64, 64, 4
    $region9: #{tpu_custom_call.1} parent=1 // pred_fallthru
      _
    // Predicated region
    $region10: #{tpu_custom_call.1} parent=1 // pred_check
      _
    $region11: #{tpu_custom_call.1} parent=1 // pred_check_branch
      %37 = sbr.rel (0) target = $region13
    $region12: #{tpu_custom_call.1} parent=1 // pred_region
      _
    $region13: #{tpu_custom_call.1} parent=1 // pred_fallthru
      _
    // Predicated region
    $region14: #{tpu_custom_call.1} parent=1 // pred_check
      _
    $region15: #{tpu_custom_call.1} parent=1 // pred_check_branch
      %39 = sbr.rel (0) target = $region17
    $region16: #{tpu_custom_call.1} parent=1 // pred_region
      _
    $region17: #{tpu_custom_call.1} parent=1 // pred_fallthru
      _
    // Predicated region
    $region18: #{tpu_custom_call.1} parent=1 // pred_check
      _
    $region19: #{tpu_custom_call.1} parent=1 // pred_check_branch
      %41 = sbr.rel (0) target = $region21
    $region20: #{tpu_custom_call.1} parent=1 // pred_region
      _
    $region21: #{tpu_custom_call.1} parent=1 // pred_fallthru
      _
    // Predicated region
    $region22: #{tpu_custom_call.1} parent=1 // pred_check
      _
    $region23: #{tpu_custom_call.1} parent=1 // pred_check_branch
      %43 = sbr.rel (0) target = $region25
    $region24: #{tpu_custom_call.1} parent=1 // pred_region
      _
    $region25: #{tpu_custom_call.1} parent=1 // pred_fallthru
      _
    // Predicated region
    $region26: #{tpu_custom_call.1} parent=1 // pred_check
      _
    $region27: #{tpu_custom_call.1} parent=1 // pred_check_branch
      %45 = sbr.rel (0) target = $region29
    $region28: #{tpu_custom_call.1} parent=1 // pred_region
      _
    $region29: #{tpu_custom_call.1} parent=1 // pred_fallthru
      _
    // Predicated region
    $region30: #{tpu_custom_call.1} parent=1 // pred_check
      _
    $region31: #{tpu_custom_call.1} parent=1 // pred_check_branch
      %47 = sbr.rel (0) target = $region33
    $region32: #{tpu_custom_call.1} parent=1 // pred_region
      %48 = dma.done [#allocation3], 128
    $region33: #{tpu_custom_call.1} parent=1 // pred_fallthru
      _
    // Predicated region
    $region34: #{tpu_custom_call.1} parent=1 // pred_check
      _
    $region35: #{tpu_custom_call.1} parent=1 // pred_check_branch
      %50 = sbr.rel (0) target = $region37
    $region36: #{tpu_custom_call.1} parent=1 // pred_region
      %51 = dma.done [#allocation5], 128
    $region37: #{tpu_custom_call.1} parent=1 // pred_fallthru
      _
    %v53 = vld [vmem:[#allocation2] sm:$0xff]
    %v54 = vpack.c.bf16 %v53, %v53
    %v55 = vld [vmem:[#allocation4] sm:$0xf]
    %v56 = vld [vmem:[#allocation4 + $0x4] sm:$0xf]
    %v57 = vld [vmem:[%s2] sm:$0x1]
    %v59 = vlaneseq
    %v60 = vshrl.u32 %v59, 7
    %v61 = vsub.s32 0, %v60
    %v62 = vrot.slane %v57, %v61
    %v66 = vunpack.c.l.b16 %v55
    %v67 = vunpack.c.l.b16 %v56
    %v68 = vpack.c.b16 %v67, %v66
    %vm70 = vcmask 130048
    %v72 = vsel %vm70, %v54, 0
    %74 = vmatprep.subr.bf16.mxu0 0
    %75 = vmatpush1.bf16.msra.mxu0 0
    %76 = vmatprep.subr.bf16.mxu0 0
    %77 = vmatpush1.bf16.msra.mxu0 0
    %78 = vmatprep.subr.bf16.mxu0 0
    %79 = vmatpush1.bf16.msra.mxu0 0
    %80 = vmatprep.subr.bf16.mxu0 0
    %81 = vmatpush1.bf16.msra.mxu0 0
    %82 = vmatprep.subr.bf16.mxu0 0
    %83 = vmatpush1.bf16.msra.mxu0 0
    %84 = vmatprep.subr.bf16.mxu0 0
    %85 = vmatpush1.bf16.msra.mxu0 0
    %86 = vmatprep.subr.bf16.mxu0 0
    %87 = vmatpush1.bf16.msra.mxu0 0
    %88 = vmatprep.subr.bf16.mxu0 0
    %89 = vmatpush1.bf16.msra.mxu0 %v68
    %90 = vmatprep.subr.bf16.mxu0 0
    %91 = vmatpush2.bf16.msra.mxu0 0
    %92 = vmatprep.subr.bf16.mxu0 0
    %93 = vmatpush2.bf16.msra.mxu0 0
    %94 = vmatprep.subr.bf16.mxu0 0
    %95 = vmatpush2.bf16.msra.mxu0 0
    %96 = vmatprep.subr.bf16.mxu0 0
    %97 = vmatpush2.bf16.msra.mxu0 0
    %98 = vmatprep.subr.bf16.mxu0 0
    %99 = vmatpush2.bf16.msra.mxu0 0
    %100 = vmatprep.subr.bf16.mxu0 0
    %101 = vmatpush2.bf16.msra.mxu0 0
    %102 = vmatprep.subr.bf16.mxu0 0
    %103 = vmatpush2.bf16.msra.mxu0 0
    %104 = vmatprep.subr.bf16.mxu0 0
    %105 = vmatpush2.bf16.msra.mxu0 0
    %106 = vmatprep.mubr.bf16.mxu0 0
    %107 = vmatmul.mubr.bf16.gmra.mxu0 %v72
    %v108 = vpop.f32.mrf.mxu0
    %v109 = vadd.f32 %v62, %v108
    %v110 = vpop.f32.mrf.mxu0
    %v111 = vpop.f32.mrf.mxu0
    %v112 = vpop.f32.mrf.mxu0
    %113 = vdwg.mxu0
    %v114 = vmax.f32 %v109, 0.0
    %v115 = vpack.c.bf16 %v114, %v114
    %v116 = vld [vmem:[%s3] sm:$0xf]
    %v117 = vld [vmem:[%s3 + $0x4] sm:$0xf]
    %v118 = vld [vmem:[%s3 + $0x8] sm:$0xf]
    %v119 = vld [vmem:[%s3 + $0xc] sm:$0xf]
    %v120 = vld [vmem:[%s3 + $0x10] sm:$0xf]
    %v121 = vld [vmem:[%s3 + $0x14] sm:$0xf]
    %v122 = vld [vmem:[%s3 + $0x18] sm:$0xf]
    %v123 = vld [vmem:[%s3 + $0x1c] sm:$0xf]
    %v124 = vld [vmem:[%s3 + $0x20] sm:$0xf]
    %v125 = vld [vmem:[%s3 + $0x24] sm:$0xf]
    %v126 = vld [vmem:[%s3 + $0x28] sm:$0xf]
    %v127 = vld [vmem:[%s3 + $0x2c] sm:$0xf]
    %v128 = vld [vmem:[%s3 + $0x30] sm:$0xf]
    %v129 = vld [vmem:[%s3 + $0x34] sm:$0xf]
    %v130 = vld [vmem:[%s3 + $0x38] sm:$0xf]
    %v131 = vld [vmem:[%s3 + $0x3c] sm:$0xf]
    %v132 = vld [vmem:[%s4] sm:$0x1]
    %v134 = vlaneseq
    %v135 = vshrl.u32 %v134, 7
    %v136 = vsub.s32 0, %v135
    %v137 = vrot.slane %v132, %v136
    %v155 = vunpack.c.l.b16 %v116
    %v156 = vunpack.c.l.b16 %v117
    %v157 = vunpack.c.l.b16 %v118
    %v158 = vunpack.c.l.b16 %v119
    %v159 = vunpack.c.l.b16 %v120
    %v160 = vunpack.c.l.b16 %v121
    %v161 = vunpack.c.l.b16 %v122
    %v162 = vunpack.c.l.b16 %v123
    %v163 = vunpack.c.l.b16 %v124
    %v164 = vunpack.c.l.b16 %v125
    %v165 = vunpack.c.l.b16 %v126
    %v166 = vunpack.c.l.b16 %v127
    %v167 = vunpack.c.l.b16 %v128
    %v168 = vunpack.c.l.b16 %v129
    %v169 = vunpack.c.l.b16 %v130
    %v170 = vunpack.c.l.b16 %v131
    %v171 = vpack.c.b16 %v156, %v155
    %v172 = vpack.c.b16 %v158, %v157
    %v173 = vpack.c.b16 %v160, %v159
    %v174 = vpack.c.b16 %v162, %v161
    %v175 = vpack.c.b16 %v164, %v163
    %v176 = vpack.c.b16 %v166, %v165
    %v177 = vpack.c.b16 %v168, %v167
    %v178 = vpack.c.b16 %v170, %v169
    %187 = vmatprep.subr.bf16.mxu0 0
    %188 = vmatpush1.bf16.msra.mxu0 %v178
    %189 = vmatprep.subr.bf16.mxu0 0
    %190 = vmatpush1.bf16.msra.mxu0 %v177
    %191 = vmatprep.subr.bf16.mxu0 0
    %192 = vmatpush1.bf16.msra.mxu0 %v176
    %193 = vmatprep.subr.bf16.mxu0 0
    %194 = vmatpush1.bf16.msra.mxu0 %v175
    %195 = vmatprep.subr.bf16.mxu0 0
    %196 = vmatpush1.bf16.msra.mxu0 %v174
    %197 = vmatprep.subr.bf16.mxu0 0
    %198 = vmatpush1.bf16.msra.mxu0 %v173
    %199 = vmatprep.subr.bf16.mxu0 0
    %200 = vmatpush1.bf16.msra.mxu0 %v172
    %201 = vmatprep.subr.bf16.mxu0 0
    %202 = vmatpush1.bf16.msra.mxu0 %v171
    %203 = vmatprep.subr.bf16.mxu0 0
    %204 = vmatpush2.bf16.msra.mxu0 0
    %205 = vmatprep.subr.bf16.mxu0 0
    %206 = vmatpush2.bf16.msra.mxu0 0
    %207 = vmatprep.subr.bf16.mxu0 0
    %208 = vmatpush2.bf16.msra.mxu0 0
    %209 = vmatprep.subr.bf16.mxu0 0
    %210 = vmatpush2.bf16.msra.mxu0 0
    %211 = vmatprep.subr.bf16.mxu0 0
    %212 = vmatpush2.bf16.msra.mxu0 0
    %213 = vmatprep.subr.bf16.mxu0 0
    %214 = vmatpush2.bf16.msra.mxu0 0
    %215 = vmatprep.subr.bf16.mxu0 0
    %216 = vmatpush2.bf16.msra.mxu0 0
    %217 = vmatprep.subr.bf16.mxu0 0
    %218 = vmatpush2.bf16.msra.mxu0 0
    %219 = vmatprep.mubr.bf16.mxu0 0
    %220 = vmatmul.mubr.bf16.gmra.mxu0 %v115
    %v221 = vpop.f32.mrf.mxu0
    %v222 = vadd.f32 %v137, %v221
    %v223 = vpop.f32.mrf.mxu0
    %v224 = vpop.f32.mrf.mxu0
    %v225 = vpop.f32.mrf.mxu0
    %226 = vdwg.mxu0
    %v227 = vmax.f32 %v222, 0.0
    %v228 = vpack.c.bf16 %v227, %v227
    %v229 = vld [vmem:[%s5] sm:$0xf]
    %v230 = vld [vmem:[%s5 + $0x4] sm:$0xf]
    %v231 = vld [vmem:[%s5 + $0x8] sm:$0xf]
    %v232 = vld [vmem:[%s5 + $0xc] sm:$0xf]
    %v233 = vld [vmem:[%s5 + $0x10] sm:$0xf]
    %v234 = vld [vmem:[%s5 + $0x14] sm:$0xf]
    %v235 = vld [vmem:[%s5 + $0x18] sm:$0xf]
    %v236 = vld [vmem:[%s5 + $0x1c] sm:$0xf]
    %v237 = vld [vmem:[%s5 + $0x20] sm:$0xf]
    %v238 = vld [vmem:[%s5 + $0x24] sm:$0xf]
    %v239 = vld [vmem:[%s5 + $0x28] sm:$0xf]
    %v240 = vld [vmem:[%s5 + $0x2c] sm:$0xf]
    %v241 = vld [vmem:[%s5 + $0x30] sm:$0xf]
    %v242 = vld [vmem:[%s5 + $0x34] sm:$0xf]
    %v243 = vld [vmem:[%s5 + $0x38] sm:$0xf]
    %v244 = vld [vmem:[%s5 + $0x3c] sm:$0xf]
    %v245 = vld [vmem:[%s6] sm:$0x1]
    %v247 = vlaneseq
    %v248 = vshrl.u32 %v247, 7
    %v249 = vsub.s32 0, %v248
    %v250 = vrot.slane %v245, %v249
    %v268 = vunpack.c.l.b16 %v229
    %v269 = vunpack.c.l.b16 %v230
    %v270 = vunpack.c.l.b16 %v231
    %v271 = vunpack.c.l.b16 %v232
    %v272 = vunpack.c.l.b16 %v233
    %v273 = vunpack.c.l.b16 %v234
    %v274 = vunpack.c.l.b16 %v235
    %v275 = vunpack.c.l.b16 %v236
    %v276 = vunpack.c.l.b16 %v237
    %v277 = vunpack.c.l.b16 %v238
    %v278 = vunpack.c.l.b16 %v239
    %v279 = vunpack.c.l.b16 %v240
    %v280 = vunpack.c.l.b16 %v241
    %v281 = vunpack.c.l.b16 %v242
    %v282 = vunpack.c.l.b16 %v243
    %v283 = vunpack.c.l.b16 %v244
    %v284 = vpack.c.b16 %v269, %v268
    %v285 = vpack.c.b16 %v271, %v270
    %v286 = vpack.c.b16 %v273, %v272
    %v287 = vpack.c.b16 %v275, %v274
    %v288 = vpack.c.b16 %v277, %v276
    %v289 = vpack.c.b16 %v279, %v278
    %v290 = vpack.c.b16 %v281, %v280
    %v291 = vpack.c.b16 %v283, %v282
    %300 = vmatprep.subr.bf16.mxu0 0
    %301 = vmatpush1.bf16.msra.mxu0 %v291
    %302 = vmatprep.subr.bf16.mxu0 0
    %303 = vmatpush1.bf16.msra.mxu0 %v290
    %304 = vmatprep.subr.bf16.mxu0 0
    %305 = vmatpush1.bf16.msra.mxu0 %v289
    %306 = vmatprep.subr.bf16.mxu0 0
    %307 = vmatpush1.bf16.msra.mxu0 %v288
    %308 = vmatprep.subr.bf16.mxu0 0
    %309 = vmatpush1.bf16.msra.mxu0 %v287
    %310 = vmatprep.subr.bf16.mxu0 0
    %311 = vmatpush1.bf16.msra.mxu0 %v286
    %312 = vmatprep.subr.bf16.mxu0 0
    %313 = vmatpush1.bf16.msra.mxu0 %v285
    %314 = vmatprep.subr.bf16.mxu0 0
    %315 = vmatpush1.bf16.msra.mxu0 %v284
    %316 = vmatprep.subr.bf16.mxu0 0
    %317 = vmatpush2.bf16.msra.mxu0 0
    %318 = vmatprep.subr.bf16.mxu0 0
    %319 = vmatpush2.bf16.msra.mxu0 0
    %320 = vmatprep.subr.bf16.mxu0 0
    %321 = vmatpush2.bf16.msra.mxu0 0
    %322 = vmatprep.subr.bf16.mxu0 0
    %323 = vmatpush2.bf16.msra.mxu0 0
    %324 = vmatprep.subr.bf16.mxu0 0
    %325 = vmatpush2.bf16.msra.mxu0 0
    %326 = vmatprep.subr.bf16.mxu0 0
    %327 = vmatpush2.bf16.msra.mxu0 0
    %328 = vmatprep.subr.bf16.mxu0 0
    %329 = vmatpush2.bf16.msra.mxu0 0
    %330 = vmatprep.subr.bf16.mxu0 0
    %331 = vmatpush2.bf16.msra.mxu0 0
    %332 = vmatprep.mubr.bf16.mxu0 0
    %333 = vmatmul.mubr.bf16.gmra.mxu0 %v228
    %v334 = vpop.f32.mrf.mxu0
    %v335 = vadd.f32 %v250, %v334
    %v336 = vpop.f32.mrf.mxu0
    %v337 = vpop.f32.mrf.mxu0
    %v338 = vpop.f32.mrf.mxu0
    %339 = vdwg.mxu0
    %vm340 = vcmask 31744
    %341 = vst.msk [vmem:[%s7] sm:$0xff] %vm340, %v335
    // Predicated region
    $region38: #{tpu_custom_call.1} parent=1 // pred_check
      _
    $region39: #{tpu_custom_call.1} parent=1 // pred_check_branch
      %343 = sbr.rel (0) target = $region41
    $region40: #{tpu_custom_call.1} parent=1 // pred_region
      _
    $region41: #{tpu_custom_call.1} parent=1 // pred_fallthru
      _
    // Predicated region
    $region42: #{tpu_custom_call.1} parent=1 // pred_check
      _
    $region43: #{tpu_custom_call.1} parent=1 // pred_check_branch
      %345 = sbr.rel (0) target = $region45
    $region44: #{tpu_custom_call.1} parent=1 // pred_region
      _
    $region45: #{tpu_custom_call.1} parent=1 // pred_fallthru
      _
    %346 = vsyncpa [#allocation3], 1
    %347 = vsyncpa [#allocation5], 1

</llo_original>
